<compile_context>
chip_gen: v7x
topology: tpu7x:2x2x1
jax: 0.10.0
libtpu: 0.0.40
codegen_flags: <defaults>
</compile_context>

<pallas_src>
import functools
import math

import jax
import jax.numpy as jnp
from jax.experimental import pallas as pl
from jax.experimental.pallas import tpu as pltpu


def _round_up(a, b):
    return -(-a // b) * b


def _pad2d_kernel(x_ref, o_ref, *, left, width):
    """Flattened (rows, W) -> (rows, W_out): zeros to pad lanes, one copy into the interior."""
    rows = o_ref.shape[0]
    if left > 0:
        o_ref[:, :left] = jnp.zeros((rows, left), o_ref.dtype)
    o_ref[:, left:left + width] = x_ref[...]
    right = o_ref.shape[1] - (left + width)
    if right > 0:
        o_ref[:, left + width:] = jnp.zeros((rows, right), o_ref.dtype)


def _pad3d_kernel(x_ref, o_ref, *, left_pad, p):
    """Lane-aligned (rows, P, inner) -> (rows, P_out, inner): pad boundary on sublane rows."""
    rows, p_out, inner = o_ref.shape
    if left_pad > 0:
        o_ref[:, :left_pad, :] = jnp.zeros((rows, left_pad, inner), o_ref.dtype)
    o_ref[:, left_pad:left_pad + p, :] = x_ref[...]
    right = p_out - (left_pad + p)
    if right > 0:
        o_ref[:, left_pad + p:, :] = jnp.zeros((rows, right, inner), o_ref.dtype)


def _vmem_budgets():
    """(per-block-set budget, vmem_limit_bytes) branched on the TPU generation's VMEM size."""
    try:
        cap = int(getattr(pltpu.get_tpu_info(), "vmem_capacity_bytes", 64 * 1024 * 1024))
    except Exception:
        cap = 64 * 1024 * 1024
    if cap >= 128 * 1024 * 1024:                       # v5e / v6e: 128 MiB physical VMEM
        return 48 * 1024 * 1024, 96 * 1024 * 1024
    return 16 * 1024 * 1024, 32 * 1024 * 1024          # v7x (64 MiB) or unknown: conservative


def zero_pad(x, dim, left_pad, right_pad):
    """Pallas equivalent of ZeroPad.forward: pad axis `dim` with zeros (negative pads crop)."""
    dim = dim % x.ndim

    # Negative pads crop (F.pad semantics) -- wrapper glue, no kernel needed.
    if left_pad < 0:
        x = jax.lax.slice_in_dim(x, -left_pad, x.shape[dim], axis=dim)
        left_pad = 0
    if right_pad < 0:
        x = jax.lax.slice_in_dim(x, 0, x.shape[dim] + right_pad, axis=dim)
        right_pad = 0

    if left_pad == 0 and right_pad == 0:
        return x                                        # nothing to pad: skip HBM round trip

    shape = x.shape
    P = shape[dim]
    P_out = P + left_pad + right_pad
    out_shape = shape[:dim] + (P_out,) + shape[dim + 1:]

    if x.size == 0:                                     # empty input -> all-zero output
        return jnp.zeros(out_shape, x.dtype)

    inner = math.prod(shape[dim + 1:])
    M = math.prod(shape[:dim])
    W, W_out = P * inner, P_out * inner
    itemsize = jnp.dtype(x.dtype).itemsize
    sublane = max(8, 32 // itemsize)                    # native sublane tile: f32 8, bf16 16, int8 32
    block_budget, vmem_limit = _vmem_budgets()

    # Double-buffered input + output block bytes per row of M.
    bytes_per_row = 2 * (W + W_out) * itemsize
    min_tm = min(M, sublane)
    if bytes_per_row * min_tm > block_budget:
        # TODO(synk): lane-tiled second grid axis (or strided HBM->HBM DMA for the interior)
        # for extremely wide rows; fall back to XLA's pad to stay within VMEM.
        pads = [(0, 0)] * x.ndim
        pads[dim] = (left_pad, right_pad)
        return jnp.pad(x, pads, mode="constant", constant_values=0)

    # Row tile: as large as the VMEM budget allows (no artificial cap), dtype-aligned, but
    # capped so big arrays still produce >=4 grid blocks (both v7x TensorCores + pipelining).
    max_rows = (block_budget // bytes_per_row) // sublane * sublane
    TM = max(max_rows, min_tm)
    target_blocks = 4
    if M >= target_blocks * sublane:
        TM = min(TM, _round_up(pl.cdiv(M, target_blocks), sublane))
    if TM >= M:
        TM = M                                          # single full-extent block (always legal)
    grid = (pl.cdiv(M, TM),)

    cost = pl.CostEstimate(flops=0, transcendentals=0,
                           bytes_accessed=int((M * W + M * W_out) * itemsize))
    cparams = pltpu.CompilerParams(dimension_semantics=("parallel",),
                                   vmem_limit_bytes=vmem_limit)

    if inner % 128 == 0:
        # Lane-aligned 3-D view: pad boundary falls on sublane rows -> unmasked lane stores.
        x3 = x.reshape(M, P, inner)
        out3 = pl.pallas_call(
            functools.partial(_pad3d_kernel, left_pad=left_pad, p=P),
            out_shape=jax.ShapeDtypeStruct((M, P_out, inner), x.dtype),
            grid=grid,
            in_specs=[pl.BlockSpec((TM, P, inner), lambda i: (i, 0, 0))],
            out_specs=pl.BlockSpec((TM, P_out, inner), lambda i: (i, 0, 0)),
            compiler_params=cparams,
            cost_estimate=cost,
        )(x3)
        return out3.reshape(out_shape)

    # General case: flattened 2-D view (free row-major reshape, no transpose).
    x2 = x.reshape(M, W)
    out2 = pl.pallas_call(
        functools.partial(_pad2d_kernel, left=left_pad * inner, width=W),
        out_shape=jax.ShapeDtypeStruct((M, W_out), x.dtype),
        grid=grid,
        in_specs=[pl.BlockSpec((TM, W), lambda i: (i, 0))],
        out_specs=pl.BlockSpec((TM, W_out), lambda i: (i, 0)),
        compiler_params=cparams,
        cost_estimate=cost,
    )(x2)
    return out2.reshape(out_shape)


if __name__ == "__main__":
    key = jax.random.PRNGKey(0)
    k1, k2 = jax.random.split(key)

    def ref_pad(x, dim, lp, rp):
        d = dim % x.ndim
        if lp < 0:
            x = jax.lax.slice_in_dim(x, -lp, x.shape[d], axis=d)
            lp = 0
        if rp < 0:
            x = jax.lax.slice_in_dim(x, 0, x.shape[d] + rp, axis=d)
            rp = 0
        pads = [(0, 0)] * x.ndim
        pads[d] = (lp, rp)
        return jnp.pad(x, pads, mode="constant", constant_values=0)

    # Case 1: NCHW input, pad the H axis (flattened 2-D path, lane-misaligned interior).
    x1 = jax.random.normal(k1, (2, 4, 16, 16), dtype=jnp.float32)
    y1 = jax.block_until_ready(zero_pad(x1, dim=2, left_pad=2, right_pad=3))
    r1 = ref_pad(x1, 2, 2, 3)
    assert y1.shape == r1.shape and y1.dtype == x1.dtype
    assert jnp.array_equal(y1, r1), "mismatch (2-D path)"

    # Case 2: trailing dims multiple of 128 (lane-aligned 3-D path).
    x2 = jax.random.normal(k2, (2, 8, 4, 128), dtype=jnp.float32)
    y2 = jax.block_until_ready(zero_pad(x2, dim=1, left_pad=1, right_pad=2))
    r2 = ref_pad(x2, 1, 1, 2)
    assert y2.shape == r2.shape and y2.dtype == x2.dtype
    assert jnp.array_equal(y2, r2), "mismatch (3-D path)"

    # Case 3: negative left pad (crop) + positive right pad on the last axis, multi-block grid.
    y3 = jax.block_until_ready(zero_pad(x1, dim=3, left_pad=-4, right_pad=2))
    r3 = ref_pad(x1, 3, -4, 2)
    assert y3.shape == r3.shape and y3.dtype == x1.dtype
    assert jnp.array_equal(y3, r3), "mismatch (negative-pad path)"

    print("KERNEL_OK")
</pallas_src>

<mosaic_0001>
module attributes {stable_mosaic.version = 11 : i64} {
  func.func @_pad2d_kernel(%arg0: i32, %arg1: memref<8x256xf32, #tpu.memory_space<vmem>>, %arg2: memref<8x336xf32, #tpu.memory_space<vmem>>) attributes {dimension_semantics = [#tpu.dimension_semantics<parallel>], iteration_bounds = array<i64: 1>, scalar_prefetch = 0 : i64, scratch_operands = 0 : i64, tpu.core_type = #tpu.core_type<tc>, window_params = [{transform_indices = @transform_0, window_bounds = array<i64: 8, 256>}, {transform_indices = @transform_1, window_bounds = array<i64: 8, 336>}]} {
    %cst = arith.constant 0.000000e+00 : f32
    %0 = vector.broadcast %cst : f32 to vector<8x32xf32>
    %c0 = arith.constant 0 : index
    %c0_0 = arith.constant 0 : index
    %1 = vector.load %arg2[%c0, %c0_0] : memref<8x336xf32, #tpu.memory_space<vmem>>, vector<8x32xf32>
    tpu.vector_store %arg2[%c0, %c0_0], %0 {strides = array<i32>} : memref<8x336xf32, #tpu.memory_space<vmem>>, vector<8x32xf32>,
    %c0_1 = arith.constant 0 : index
    %c0_2 = arith.constant 0 : index
    %2 = vector.load %arg1[%c0_1, %c0_2] : memref<8x256xf32, #tpu.memory_space<vmem>>, vector<8x256xf32>
    %c0_3 = arith.constant 0 : index
    %c32 = arith.constant 32 : index
    %3 = vector.load %arg2[%c0_3, %c32] : memref<8x336xf32, #tpu.memory_space<vmem>>, vector<8x256xf32>
    tpu.vector_store %arg2[%c0_3, %c32], %2 {strides = array<i32>} : memref<8x336xf32, #tpu.memory_space<vmem>>, vector<8x256xf32>,
    %cst_4 = arith.constant 0.000000e+00 : f32
    %4 = vector.broadcast %cst_4 : f32 to vector<8x48xf32>
    %c0_5 = arith.constant 0 : index
    %c288 = arith.constant 288 : index
    %5 = vector.load %arg2[%c0_5, %c288] : memref<8x336xf32, #tpu.memory_space<vmem>>, vector<8x48xf32>
    tpu.vector_store %arg2[%c0_5, %c288], %4 {strides = array<i32>} : memref<8x336xf32, #tpu.memory_space<vmem>>, vector<8x48xf32>,
    return
  }
  func.func @transform_0(%arg0: i32) -> (i32, i32) {
    %c0_i32 = arith.constant 0 : i32
    %c0_i32_0 = arith.constant 0 : i32
    return %arg0, %c0_i32 : i32, i32
  }
  func.func @transform_1(%arg0: i32) -> (i32, i32) {
    %c0_i32 = arith.constant 0 : i32
    %c0_i32_0 = arith.constant 0 : i32
    return %arg0, %c0_i32 : i32, i32
  }
}

</mosaic_0001>

<llo_original>
// kernel: tpu_custom_call.1
$region0: #{tpu_custom_call.1}
  #allocation0 [shape = 'u32[]', space=smem, size = 0x4, offset = 0x4, fixed_abs, tag = 'smem constant byte address 0x4 - core index']
  #allocation1 [shape = 'u32[144,128]{1,0:T(1,128)}', space=vmem, size = 0x12000, scoped, tag = 'internal scratch']
  %s0 = inlined_call_operand.hbm [shape: f32[8,256], index: 0, kind: input, shape index: {}]
  %s1 = inlined_call_operand.hbm [shape: f32[8,336], index: 1, kind: output, shape index: {}]
  %s2 = sld [smem:[#allocation0]]
  $region18: #{tpu_custom_call.1} parent=0
    _
  %s4 = ssub.s32 1, %s2
  %s5 = scalar_select 0, %s4, %s2
  $region1: #{tpu_custom_call.1} parent=0
    #allocation2 [shape = 'u8[8192]{0}', space=vmem, size = 0x2000, scoped, tag = 'input window, operand 0, single buffered']
    #allocation3 [shape = 's32[1]{0}', space=sflag, size = 0x4, scoped, tag = 'scoped memory for tpu_custom_call.1']
    #allocation4 [shape = 's32[1]{0}', space=sflag, size = 0x4, scoped, tag = 'scoped memory for tpu_custom_call.1']
    #allocation5 [shape = 'u8[12288]{0}', space=vmem, size = 0x3000, scoped, tag = 'output window, operand 0, single buffered']
    %6 = vsyncpa [#allocation3], 0
    %7 = vsyncpa [#allocation4], 0
    // Predicated region
    $region2: #{tpu_custom_call.1} parent=1 // pred_check
      _
    $region3: #{tpu_custom_call.1} parent=1 // pred_check_branch
      %9 = sbr.rel (0) target = $region5
    $region4: #{tpu_custom_call.1} parent=1 // pred_region
      %s11 = ssub.s32 256, 256
      %12 = vsyncadd [#allocation3], %s11
      %s14 = sshll.u32 [#allocation2], 4
      %s15 = int_to_ptr.vmem [resolvable:$true] %s14
      %17 = dma.hbm_to_vmem [thread:$0]  %s0, 256, %s15, [#allocation3]
    $region5: #{tpu_custom_call.1} parent=1 // pred_fallthru
      _
    // Predicated region
    $region6: #{tpu_custom_call.1} parent=1 // pred_check
      _
    $region7: #{tpu_custom_call.1} parent=1 // pred_check_branch
      %19 = sbr.rel (0) target = $region9
    $region8: #{tpu_custom_call.1} parent=1 // pred_region
      %20 = dma.done [#allocation3], 256
    $region9: #{tpu_custom_call.1} parent=1 // pred_fallthru
      _
    %vm21 = vcmask 261120
    %22 = vst.msk [vmem:[#allocation5] sm:$0xff] %vm21, 0.0
    %v23 = vld [vmem:[#allocation2] sm:$0xff]
    %v24 = vld [vmem:[#allocation2 + $0x8] sm:$0xff]
    %27 = vrot.lane.b32.xlu0 %v23, 32
    %v28 = vpop.permute.xlu0 %27
    %29 = vrot.lane.b32.xlu0 %v24, 32
    %v30 = vpop.permute.xlu0 %29
    %v31 = vsel %vm21, %v28, %v30
    %vm35 = vcmask 1047808
    %36 = vst.msk [vmem:[#allocation5] sm:$0xff] %vm35, %v28
    %37 = vst [vmem:[#allocation5 + $0x8] sm:$0xff] %v31
    %38 = vst.msk [vmem:[#allocation5 + $0x10] sm:$0xff] %vm21, %v30
    %vm39 = vcmask 654592
    %40 = vst.msk [vmem:[#allocation5 + $0x10] sm:$0xff] %vm39, 0.0
    // Predicated region
    $region10: #{tpu_custom_call.1} parent=1 // pred_check
      _
    $region11: #{tpu_custom_call.1} parent=1 // pred_check_branch
      %42 = sbr.rel (0) target = $region13
    $region12: #{tpu_custom_call.1} parent=1 // pred_region
      %s44 = ssub.s32 384, 384
      %45 = vsyncadd [#allocation4], %s44
      %s47 = sshll.u32 [#allocation5], 4
      %s48 = int_to_ptr.vmem [resolvable:$true] %s47
      %50 = dma.vmem_to_hbm [thread:$0]  %s48, 384, %s1, [#allocation4]
    $region13: #{tpu_custom_call.1} parent=1 // pred_fallthru
      _
    // Predicated region
    $region14: #{tpu_custom_call.1} parent=1 // pred_check
      _
    $region15: #{tpu_custom_call.1} parent=1 // pred_check_branch
      %52 = sbr.rel (0) target = $region17
    $region16: #{tpu_custom_call.1} parent=1 // pred_region
      %53 = dma.done [#allocation4], 384
    $region17: #{tpu_custom_call.1} parent=1 // pred_fallthru
      _
    %54 = vsyncpa [#allocation3], 1
    %55 = vsyncpa [#allocation4], 1

</llo_original>
